<compile_context>
chip_gen: v7x
topology: tpu7x:2x2x1
jax: 0.10.0
libtpu: 0.0.40
codegen_flags: <defaults>
</compile_context>

<pallas_src>
import functools

import jax
import jax.numpy as jnp
from jax.experimental import pallas as pl
from jax.experimental.pallas import tpu as pltpu


def spatial_gate_kernel(x_ref, w1t_ref, p_ref, o_ref, *, H, W):
    """Lane-dense layout: spatial dim HW = H*W is minor-most everywhere.

    x_ref : (N, C, HW)          w1t_ref: (Cr, C)
    p_ref : (8, 128) packed params:
              col 0 -> gamma (Cr,)   col 1 -> beta (Cr,)   col 2 row 0 -> b2
              cols 3..11 -> 3x3 conv weights, tap-major (k = kh*3 + kw), (Cr,) each
    o_ref : (N, C, HW)
    """
    N, C, HW = x_ref.shape
    Cr = w1t_ref.shape[0]

    w1t = w1t_ref[...]                               # (Cr, C)
    gamma = p_ref[0:Cr, 0:1]                         # (Cr, 1)
    beta = p_ref[0:Cr, 1:2]                          # (Cr, 1)
    b2 = p_ref[0:1, 2:3]                             # (1, 1)

    # ---- 1x1 conv on the MXU + one-pass BN statistics (b1 dropped: cancelled by BN) ----
    xs, hs = [], []
    s1 = jnp.zeros((Cr, 1), jnp.float32)
    s2 = jnp.zeros((Cr, 1), jnp.float32)
    for n in range(N):
        xn = x_ref[n]                                # (C, HW); kept live for the gate store
        xs.append(xn)
        h = jnp.dot(w1t, xn.astype(jnp.float32),
                    preferred_element_type=jnp.float32)          # (Cr, HW)
        hs.append(h)
        s1 = s1 + jnp.sum(h, axis=1, keepdims=True)
        s2 = s2 + jnp.sum(h * h, axis=1, keepdims=True)

    inv_count = 1.0 / float(N * HW)
    mu = s1 * inv_count                                           # (Cr, 1)
    var = s2 * inv_count - mu * mu                                # biased batch variance
    bn_scale = gamma * jax.lax.rsqrt(var + 1e-5)                  # (Cr, 1)
    bn_shift = beta - mu * bn_scale                               # (Cr, 1)

    # ---- hoisted per-tap lane shifts and boundary-masked weights (batch-invariant) ----
    lane = jax.lax.broadcasted_iota(jnp.int32, (1, HW), 1)
    if W & (W - 1) == 0:                              # power-of-two fast path
        col = lane & (W - 1)
        row = lane >> (W.bit_length() - 1)
    else:
        col = lane % W
        row = lane // W
    shifts, wm = [], []
    for k in range(9):
        dy, dx = k // 3 - 1, k % 3 - 1
        shifts.append((-(dy * W + dx)) % HW)
        valid = ((col + dx >= 0) & (col + dx <= W - 1)
                 & (row + dy >= 0) & (row + dy <= H - 1))         # (1, HW)
        w2_k = p_ref[0:Cr, 3 + k:4 + k]                           # (Cr, 1)
        wm.append(jnp.where(valid, w2_k, 0.0))                    # (Cr, HW) mask folded into weight

    # ---- per-sample: BN affine + ReLU, 3x3 conv via XLU rolls, sigmoid gate ----
    for n in range(N):
        h = jnp.maximum(hs[n] * bn_scale + bn_shift, 0.0)         # (Cr, HW)
        acc = h * wm[4]                                           # center tap (shift == 0)
        for k in range(9):
            if k == 4:
                continue
            acc = acc + pltpu.roll(h, shift=shifts[k], axis=1) * wm[k]
        att_raw = jnp.sum(acc, axis=0, keepdims=True) + b2        # (1, HW)
        att = jax.nn.sigmoid(att_raw)
        o_ref[n] = (xs[n] * att).astype(o_ref.dtype)              # reuse already-loaded x


def spatial_gate(x_nchw, w1, b1, gamma, beta, w2, b2):
    """x_nchw: (N, C, H, W) fp32.  Returns (N, C, H, W)."""
    N, C, H, W = x_nchw.shape
    Cr = w1.shape[1]
    HW = H * W
    x = x_nchw.reshape(N, C, HW)                    # free reshape: HW stays minor-most

    # b1 intentionally unused: with batch-stat BN right after the 1x1 conv,
    # a per-channel bias is exactly cancelled (only valid for batch-stat BN).
    del b1

    # Pack all sub-vreg parameters into a single (8,128) f32 buffer (one DMA).
    params = jnp.zeros((8, 128), jnp.float32)
    params = params.at[:Cr, 0].set(gamma.astype(jnp.float32))
    params = params.at[:Cr, 1].set(beta.astype(jnp.float32))
    params = params.at[0, 2].set(b2.astype(jnp.float32)[0])
    params = params.at[:Cr, 3:12].set(w2.reshape(9, Cr).astype(jnp.float32).T)

    kernel = functools.partial(spatial_gate_kernel, H=H, W=W)
    out = pl.pallas_call(
        kernel,
        out_shape=jax.ShapeDtypeStruct((N, C, HW), x.dtype),
        grid=(1,),   # tiny problem; batch-stat BN couples samples -> single step
        in_specs=[
            pl.BlockSpec((N, C, HW), lambda i: (0, 0, 0)),   # x
            pl.BlockSpec((Cr, C), lambda i: (0, 0)),         # w1^T
            pl.BlockSpec((8, 128), lambda i: (0, 0)),        # packed small params
        ],
        out_specs=pl.BlockSpec((N, C, HW), lambda i: (0, 0, 0)),
        compiler_params=pltpu.CompilerParams(dimension_semantics=("arbitrary",)),
    )(x,
      jnp.transpose(w1, (1, 0)).astype(jnp.float32),         # (Cr, C)
      params)

    return out.reshape(N, C, H, W)


def spatial_gate_reference(x_nchw, w1, b1, gamma, beta, w2, b2):
    """Pure-JAX NCHW reference (mirrors the PyTorch module in training mode)."""
    C, Cr = w1.shape
    w1_oihw = jnp.transpose(w1, (1, 0))[:, :, None, None]      # (Cr, C, 1, 1)
    h = jax.lax.conv_general_dilated(
        x_nchw, w1_oihw, (1, 1), 'VALID',
        dimension_numbers=('NCHW', 'OIHW', 'NCHW'))
    h = h + b1.reshape(1, Cr, 1, 1)
    mu = jnp.mean(h, axis=(0, 2, 3), keepdims=True)
    var = jnp.mean(jnp.square(h - mu), axis=(0, 2, 3), keepdims=True)
    h = (h - mu) * jax.lax.rsqrt(var + 1e-5)
    h = h * gamma.reshape(1, Cr, 1, 1) + beta.reshape(1, Cr, 1, 1)
    h = jnp.maximum(h, 0.0)
    w2_oihw = jnp.transpose(w2, (2, 0, 1))[None]               # (1, Cr, 3, 3)
    att = jax.lax.conv_general_dilated(
        h, w2_oihw, (1, 1), ((1, 1), (1, 1)),
        dimension_numbers=('NCHW', 'OIHW', 'NCHW'))
    att = jax.nn.sigmoid(att + b2.reshape(1, 1, 1, 1))
    return x_nchw * att


if __name__ == "__main__":
    key = jax.random.PRNGKey(0)
    kx, k1, k2, k3, k4, k5, k6 = jax.random.split(key, 7)

    N, C, H, W = 2, 32, 16, 16       # gate_channels=32
    reduction_ratio = 8
    Cr = C // reduction_ratio        # = 4

    x = jax.random.normal(kx, (N, C, H, W), jnp.float32)

    # Deterministic synthetic parameters (shapes follow the nn.Module __init__).
    w1 = jax.random.normal(k1, (C, Cr), jnp.float32) * (1.0 / (C ** 0.5))
    b1 = jax.random.normal(k2, (Cr,), jnp.float32) * 0.1
    gamma = 1.0 + 0.1 * jax.random.normal(k3, (Cr,), jnp.float32)
    beta = 0.1 * jax.random.normal(k4, (Cr,), jnp.float32)
    w2 = jax.random.normal(k5, (3, 3, Cr), jnp.float32) * (1.0 / ((9 * Cr) ** 0.5))
    b2 = jax.random.normal(k6, (1,), jnp.float32) * 0.1

    out = spatial_gate(x, w1, b1, gamma, beta, w2, b2)
    out = jax.block_until_ready(out)

    ref = spatial_gate_reference(x, w1, b1, gamma, beta, w2, b2)
    assert out.shape == x.shape and out.dtype == x.dtype
    if not jnp.allclose(out, ref, atol=1e-3, rtol=1e-3):
        raise AssertionError(
            f"mismatch, max abs err = {float(jnp.max(jnp.abs(out - ref)))}")

    print("KERNEL_OK")
</pallas_src>

<mosaic_0001>
module attributes {stable_mosaic.version = 11 : i64} {
  func.func @spatial_gate_kernel(%arg0: i32, %arg1: memref<2x32x256xf32, #tpu.memory_space<vmem>>, %arg2: memref<4x32xf32, #tpu.memory_space<vmem>>, %arg3: memref<8x128xf32, #tpu.memory_space<vmem>>, %arg4: memref<2x32x256xf32, #tpu.memory_space<vmem>>) attributes {dimension_semantics = [#tpu.dimension_semantics<arbitrary>], iteration_bounds = array<i64: 1>, scalar_prefetch = 0 : i64, scratch_operands = 0 : i64, tpu.core_type = #tpu.core_type<tc>, window_params = [{pipeline_mode = #tpu.pipeline_mode<synchronous>, transform_indices = @transform_0, window_bounds = array<i64: 2, 32, 256>}, {pipeline_mode = #tpu.pipeline_mode<synchronous>, transform_indices = @transform_1, window_bounds = array<i64: 4, 32>}, {pipeline_mode = #tpu.pipeline_mode<synchronous>, transform_indices = @transform_2, window_bounds = array<i64: 8, 128>}, {pipeline_mode = #tpu.pipeline_mode<synchronous>, transform_indices = @transform_3, window_bounds = array<i64: 2, 32, 256>}]} {
    %c0 = arith.constant 0 : index
    %c0_0 = arith.constant 0 : index
    %0 = vector.load %arg2[%c0, %c0_0] : memref<4x32xf32, #tpu.memory_space<vmem>>, vector<4x32xf32>
    %c0_1 = arith.constant 0 : index
    %c0_2 = arith.constant 0 : index
    %1 = vector.load %arg3[%c0_1, %c0_2] : memref<8x128xf32, #tpu.memory_space<vmem>>, vector<4x1xf32>
    %c0_3 = arith.constant 0 : index
    %c1 = arith.constant 1 : index
    %2 = vector.load %arg3[%c0_3, %c1] : memref<8x128xf32, #tpu.memory_space<vmem>>, vector<4x1xf32>
    %c0_4 = arith.constant 0 : index
    %c2 = arith.constant 2 : index
    %3 = vector.load %arg3[%c0_4, %c2] : memref<8x128xf32, #tpu.memory_space<vmem>>, vector<1x1xf32>
    %cst = arith.constant 0.000000e+00 : f32
    %4 = vector.broadcast %cst : f32 to vector<4x1xf32>
    %cst_5 = arith.constant 0.000000e+00 : f32
    %5 = vector.broadcast %cst_5 : f32 to vector<4x1xf32>
    %c0_6 = arith.constant 0 : index
    %c0_7 = arith.constant 0 : index
    %c0_8 = arith.constant 0 : index
    %6 = vector.load %arg1[%c0_6, %c0_7, %c0_8] : memref<2x32x256xf32, #tpu.memory_space<vmem>>, vector<1x32x256xf32>
    %7 = vector.shape_cast %6 : vector<1x32x256xf32> to vector<32x256xf32>
    %cst_9 = arith.constant dense<0.000000e+00> : vector<4x256xf32>
    %8 = tpu.matmul %0, %7, %cst_9 {dimension_numbers = #tpu.dot_dimension_numbers<[1], [0], [0], [1], [0, 0, 1, 1], [], []>} : vector<4x32xf32>, vector<32x256xf32>, vector<4x256xf32> -> vector<4x256xf32>
    %cst_10 = arith.constant dense<0.000000e+00> : vector<4xf32>
    %9 = vector.multi_reduction <add>, %8, %cst_10 [1] : vector<4x256xf32> to vector<4xf32>
    %10 = vector.shape_cast %9 : vector<4xf32> to vector<4x1xf32>
    %11 = arith.addf %4, %10 : vector<4x1xf32>
    %12 = arith.mulf %8, %8 : vector<4x256xf32>
    %cst_11 = arith.constant dense<0.000000e+00> : vector<4xf32>
    %13 = vector.multi_reduction <add>, %12, %cst_11 [1] : vector<4x256xf32> to vector<4xf32>
    %14 = vector.shape_cast %13 : vector<4xf32> to vector<4x1xf32>
    %15 = arith.addf %5, %14 : vector<4x1xf32>
    %c1_12 = arith.constant 1 : index
    %c0_13 = arith.constant 0 : index
    %c0_14 = arith.constant 0 : index
    %16 = vector.load %arg1[%c1_12, %c0_13, %c0_14] : memref<2x32x256xf32, #tpu.memory_space<vmem>>, vector<1x32x256xf32>
    %17 = vector.shape_cast %16 : vector<1x32x256xf32> to vector<32x256xf32>
    %cst_15 = arith.constant dense<0.000000e+00> : vector<4x256xf32>
    %18 = tpu.matmul %0, %17, %cst_15 {dimension_numbers = #tpu.dot_dimension_numbers<[1], [0], [0], [1], [0, 0, 1, 1], [], []>} : vector<4x32xf32>, vector<32x256xf32>, vector<4x256xf32> -> vector<4x256xf32>
    %cst_16 = arith.constant dense<0.000000e+00> : vector<4xf32>
    %19 = vector.multi_reduction <add>, %18, %cst_16 [1] : vector<4x256xf32> to vector<4xf32>
    %20 = vector.shape_cast %19 : vector<4xf32> to vector<4x1xf32>
    %21 = arith.addf %11, %20 : vector<4x1xf32>
    %22 = arith.mulf %18, %18 : vector<4x256xf32>
    %cst_17 = arith.constant dense<0.000000e+00> : vector<4xf32>
    %23 = vector.multi_reduction <add>, %22, %cst_17 [1] : vector<4x256xf32> to vector<4xf32>
    %24 = vector.shape_cast %23 : vector<4xf32> to vector<4x1xf32>
    %25 = arith.addf %15, %24 : vector<4x1xf32>
    %cst_18 = arith.constant 0.001953125 : f32
    %26 = vector.broadcast %cst_18 : f32 to vector<4x1xf32>
    %27 = arith.mulf %21, %26 : vector<4x1xf32>
    %cst_19 = arith.constant 0.001953125 : f32
    %28 = vector.broadcast %cst_19 : f32 to vector<4x1xf32>
    %29 = arith.mulf %25, %28 : vector<4x1xf32>
    %30 = arith.mulf %27, %27 : vector<4x1xf32>
    %31 = arith.subf %29, %30 : vector<4x1xf32>
    %cst_20 = arith.constant 9.99999974E-6 : f32
    %32 = vector.broadcast %cst_20 : f32 to vector<4x1xf32>
    %33 = arith.addf %31, %32 : vector<4x1xf32>
    %34 = math.rsqrt %33 : vector<4x1xf32>
    %35 = arith.mulf %1, %34 : vector<4x1xf32>
    %36 = arith.mulf %27, %35 : vector<4x1xf32>
    %37 = arith.subf %2, %36 : vector<4x1xf32>
    %38 = tpu.iota {dimensions = array<i32: 1>} : vector<1x256xi32>
    %c15_i32 = arith.constant 15 : i32
    %39 = vector.broadcast %c15_i32 : i32 to vector<1x256xi32>
    %40 = arith.andi %38, %39 : vector<1x256xi32>
    %c4_i32 = arith.constant 4 : i32
    %41 = vector.broadcast %c4_i32 : i32 to vector<1x256xi32>
    %42 = arith.shrsi %38, %41 : vector<1x256xi32>
    %c-1_i32 = arith.constant -1 : i32
    %43 = vector.broadcast %c-1_i32 : i32 to vector<1x256xi32>
    %44 = arith.addi %40, %43 : vector<1x256xi32>
    %c0_i32 = arith.constant 0 : i32
    %45 = vector.broadcast %c0_i32 : i32 to vector<1x256xi32>
    %46 = arith.cmpi sge, %44, %45 : vector<1x256xi32>
    %c-1_i32_21 = arith.constant -1 : i32
    %47 = vector.broadcast %c-1_i32_21 : i32 to vector<1x256xi32>
    %48 = arith.addi %40, %47 : vector<1x256xi32>
    %c15_i32_22 = arith.constant 15 : i32
    %49 = vector.broadcast %c15_i32_22 : i32 to vector<1x256xi32>
    %50 = arith.cmpi sle, %48, %49 : vector<1x256xi32>
    %51 = arith.andi %46, %50 : vector<1x256xi1>
    %c-1_i32_23 = arith.constant -1 : i32
    %52 = vector.broadcast %c-1_i32_23 : i32 to vector<1x256xi32>
    %53 = arith.addi %42, %52 : vector<1x256xi32>
    %c0_i32_24 = arith.constant 0 : i32
    %54 = vector.broadcast %c0_i32_24 : i32 to vector<1x256xi32>
    %55 = arith.cmpi sge, %53, %54 : vector<1x256xi32>
    %56 = arith.andi %51, %55 : vector<1x256xi1>
    %c-1_i32_25 = arith.constant -1 : i32
    %57 = vector.broadcast %c-1_i32_25 : i32 to vector<1x256xi32>
    %58 = arith.addi %42, %57 : vector<1x256xi32>
    %c15_i32_26 = arith.constant 15 : i32
    %59 = vector.broadcast %c15_i32_26 : i32 to vector<1x256xi32>
    %60 = arith.cmpi sle, %58, %59 : vector<1x256xi32>
    %61 = arith.andi %56, %60 : vector<1x256xi1>
    %c0_27 = arith.constant 0 : index
    %c3 = arith.constant 3 : index
    %62 = vector.load %arg3[%c0_27, %c3] : memref<8x128xf32, #tpu.memory_space<vmem>>, vector<4x1xf32>
    %cst_28 = arith.constant 0.000000e+00 : f32
    %63 = vector.shape_cast %61 : vector<1x256xi1> to vector<1x256xi1>
    %64 = vector.broadcast %63 : vector<1x256xi1> to vector<4x256xi1>
    %65 = vector.shape_cast %62 : vector<4x1xf32> to vector<4x1xf32>
    %66 = vector.broadcast %65 : vector<4x1xf32> to vector<4x256xf32>
    %67 = vector.broadcast %cst_28 : f32 to vector<4x256xf32>
    %68 = arith.select %64, %66, %67 : vector<4x256xi1>, vector<4x256xf32>
    %c0_i32_29 = arith.constant 0 : i32
    %69 = vector.broadcast %c0_i32_29 : i32 to vector<1x256xi32>
    %70 = arith.addi %40, %69 : vector<1x256xi32>
    %c0_i32_30 = arith.constant 0 : i32
    %71 = vector.broadcast %c0_i32_30 : i32 to vector<1x256xi32>
    %72 = arith.cmpi sge, %70, %71 : vector<1x256xi32>
    %c0_i32_31 = arith.constant 0 : i32
    %73 = vector.broadcast %c0_i32_31 : i32 to vector<1x256xi32>
    %74 = arith.addi %40, %73 : vector<1x256xi32>
    %c15_i32_32 = arith.constant 15 : i32
    %75 = vector.broadcast %c15_i32_32 : i32 to vector<1x256xi32>
    %76 = arith.cmpi sle, %74, %75 : vector<1x256xi32>
    %77 = arith.andi %72, %76 : vector<1x256xi1>
    %c-1_i32_33 = arith.constant -1 : i32
    %78 = vector.broadcast %c-1_i32_33 : i32 to vector<1x256xi32>
    %79 = arith.addi %42, %78 : vector<1x256xi32>
    %c0_i32_34 = arith.constant 0 : i32
    %80 = vector.broadcast %c0_i32_34 : i32 to vector<1x256xi32>
    %81 = arith.cmpi sge, %79, %80 : vector<1x256xi32>
    %82 = arith.andi %77, %81 : vector<1x256xi1>
    %c-1_i32_35 = arith.constant -1 : i32
    %83 = vector.broadcast %c-1_i32_35 : i32 to vector<1x256xi32>
    %84 = arith.addi %42, %83 : vector<1x256xi32>
    %c15_i32_36 = arith.constant 15 : i32
    %85 = vector.broadcast %c15_i32_36 : i32 to vector<1x256xi32>
    %86 = arith.cmpi sle, %84, %85 : vector<1x256xi32>
    %87 = arith.andi %82, %86 : vector<1x256xi1>
    %c0_37 = arith.constant 0 : index
    %c4 = arith.constant 4 : index
    %88 = vector.load %arg3[%c0_37, %c4] : memref<8x128xf32, #tpu.memory_space<vmem>>, vector<4x1xf32>
    %cst_38 = arith.constant 0.000000e+00 : f32
    %89 = vector.shape_cast %87 : vector<1x256xi1> to vector<1x256xi1>
    %90 = vector.broadcast %89 : vector<1x256xi1> to vector<4x256xi1>
    %91 = vector.shape_cast %88 : vector<4x1xf32> to vector<4x1xf32>
    %92 = vector.broadcast %91 : vector<4x1xf32> to vector<4x256xf32>
    %93 = vector.broadcast %cst_38 : f32 to vector<4x256xf32>
    %94 = arith.select %90, %92, %93 : vector<4x256xi1>, vector<4x256xf32>
    %c1_i32 = arith.constant 1 : i32
    %95 = vector.broadcast %c1_i32 : i32 to vector<1x256xi32>
    %96 = arith.addi %40, %95 : vector<1x256xi32>
    %c0_i32_39 = arith.constant 0 : i32
    %97 = vector.broadcast %c0_i32_39 : i32 to vector<1x256xi32>
    %98 = arith.cmpi sge, %96, %97 : vector<1x256xi32>
    %c1_i32_40 = arith.constant 1 : i32
    %99 = vector.broadcast %c1_i32_40 : i32 to vector<1x256xi32>
    %100 = arith.addi %40, %99 : vector<1x256xi32>
    %c15_i32_41 = arith.constant 15 : i32
    %101 = vector.broadcast %c15_i32_41 : i32 to vector<1x256xi32>
    %102 = arith.cmpi sle, %100, %101 : vector<1x256xi32>
    %103 = arith.andi %98, %102 : vector<1x256xi1>
    %c-1_i32_42 = arith.constant -1 : i32
    %104 = vector.broadcast %c-1_i32_42 : i32 to vector<1x256xi32>
    %105 = arith.addi %42, %104 : vector<1x256xi32>
    %c0_i32_43 = arith.constant 0 : i32
    %106 = vector.broadcast %c0_i32_43 : i32 to vector<1x256xi32>
    %107 = arith.cmpi sge, %105, %106 : vector<1x256xi32>
    %108 = arith.andi %103, %107 : vector<1x256xi1>
    %c-1_i32_44 = arith.constant -1 : i32
    %109 = vector.broadcast %c-1_i32_44 : i32 to vector<1x256xi32>
    %110 = arith.addi %42, %109 : vector<1x256xi32>
    %c15_i32_45 = arith.constant 15 : i32
    %111 = vector.broadcast %c15_i32_45 : i32 to vector<1x256xi32>
    %112 = arith.cmpi sle, %110, %111 : vector<1x256xi32>
    %113 = arith.andi %108, %112 : vector<1x256xi1>
    %c0_46 = arith.constant 0 : index
    %c5 = arith.constant 5 : index
    %114 = vector.load %arg3[%c0_46, %c5] : memref<8x128xf32, #tpu.memory_space<vmem>>, vector<4x1xf32>
    %cst_47 = arith.constant 0.000000e+00 : f32
    %115 = vector.shape_cast %113 : vector<1x256xi1> to vector<1x256xi1>
    %116 = vector.broadcast %115 : vector<1x256xi1> to vector<4x256xi1>
    %117 = vector.shape_cast %114 : vector<4x1xf32> to vector<4x1xf32>
    %118 = vector.broadcast %117 : vector<4x1xf32> to vector<4x256xf32>
    %119 = vector.broadcast %cst_47 : f32 to vector<4x256xf32>
    %120 = arith.select %116, %118, %119 : vector<4x256xi1>, vector<4x256xf32>
    %c-1_i32_48 = arith.constant -1 : i32
    %121 = vector.broadcast %c-1_i32_48 : i32 to vector<1x256xi32>
    %122 = arith.addi %40, %121 : vector<1x256xi32>
    %c0_i32_49 = arith.constant 0 : i32
    %123 = vector.broadcast %c0_i32_49 : i32 to vector<1x256xi32>
    %124 = arith.cmpi sge, %122, %123 : vector<1x256xi32>
    %c-1_i32_50 = arith.constant -1 : i32
    %125 = vector.broadcast %c-1_i32_50 : i32 to vector<1x256xi32>
    %126 = arith.addi %40, %125 : vector<1x256xi32>
    %c15_i32_51 = arith.constant 15 : i32
    %127 = vector.broadcast %c15_i32_51 : i32 to vector<1x256xi32>
    %128 = arith.cmpi sle, %126, %127 : vector<1x256xi32>
    %129 = arith.andi %124, %128 : vector<1x256xi1>
    %c0_i32_52 = arith.constant 0 : i32
    %130 = vector.broadcast %c0_i32_52 : i32 to vector<1x256xi32>
    %131 = arith.addi %42, %130 : vector<1x256xi32>
    %c0_i32_53 = arith.constant 0 : i32
    %132 = vector.broadcast %c0_i32_53 : i32 to vector<1x256xi32>
    %133 = arith.cmpi sge, %131, %132 : vector<1x256xi32>
    %134 = arith.andi %129, %133 : vector<1x256xi1>
    %c0_i32_54 = arith.constant 0 : i32
    %135 = vector.broadcast %c0_i32_54 : i32 to vector<1x256xi32>
    %136 = arith.addi %42, %135 : vector<1x256xi32>
    %c15_i32_55 = arith.constant 15 : i32
    %137 = vector.broadcast %c15_i32_55 : i32 to vector<1x256xi32>
    %138 = arith.cmpi sle, %136, %137 : vector<1x256xi32>
    %139 = arith.andi %134, %138 : vector<1x256xi1>
    %c0_56 = arith.constant 0 : index
    %c6 = arith.constant 6 : index
    %140 = vector.load %arg3[%c0_56, %c6] : memref<8x128xf32, #tpu.memory_space<vmem>>, vector<4x1xf32>
    %cst_57 = arith.constant 0.000000e+00 : f32
    %141 = vector.shape_cast %139 : vector<1x256xi1> to vector<1x256xi1>
    %142 = vector.broadcast %141 : vector<1x256xi1> to vector<4x256xi1>
    %143 = vector.shape_cast %140 : vector<4x1xf32> to vector<4x1xf32>
    %144 = vector.broadcast %143 : vector<4x1xf32> to vector<4x256xf32>
    %145 = vector.broadcast %cst_57 : f32 to vector<4x256xf32>
    %146 = arith.select %142, %144, %145 : vector<4x256xi1>, vector<4x256xf32>
    %c0_i32_58 = arith.constant 0 : i32
    %147 = vector.broadcast %c0_i32_58 : i32 to vector<1x256xi32>
    %148 = arith.addi %40, %147 : vector<1x256xi32>
    %c0_i32_59 = arith.constant 0 : i32
    %149 = vector.broadcast %c0_i32_59 : i32 to vector<1x256xi32>
    %150 = arith.cmpi sge, %148, %149 : vector<1x256xi32>
    %c0_i32_60 = arith.constant 0 : i32
    %151 = vector.broadcast %c0_i32_60 : i32 to vector<1x256xi32>
    %152 = arith.addi %40, %151 : vector<1x256xi32>
    %c15_i32_61 = arith.constant 15 : i32
    %153 = vector.broadcast %c15_i32_61 : i32 to vector<1x256xi32>
    %154 = arith.cmpi sle, %152, %153 : vector<1x256xi32>
    %155 = arith.andi %150, %154 : vector<1x256xi1>
    %c0_i32_62 = arith.constant 0 : i32
    %156 = vector.broadcast %c0_i32_62 : i32 to vector<1x256xi32>
    %157 = arith.addi %42, %156 : vector<1x256xi32>
    %c0_i32_63 = arith.constant 0 : i32
    %158 = vector.broadcast %c0_i32_63 : i32 to vector<1x256xi32>
    %159 = arith.cmpi sge, %157, %158 : vector<1x256xi32>
    %160 = arith.andi %155, %159 : vector<1x256xi1>
    %c0_i32_64 = arith.constant 0 : i32
    %161 = vector.broadcast %c0_i32_64 : i32 to vector<1x256xi32>
    %162 = arith.addi %42, %161 : vector<1x256xi32>
    %c15_i32_65 = arith.constant 15 : i32
    %163 = vector.broadcast %c15_i32_65 : i32 to vector<1x256xi32>
    %164 = arith.cmpi sle, %162, %163 : vector<1x256xi32>
    %165 = arith.andi %160, %164 : vector<1x256xi1>
    %c0_66 = arith.constant 0 : index
    %c7 = arith.constant 7 : index
    %166 = vector.load %arg3[%c0_66, %c7] : memref<8x128xf32, #tpu.memory_space<vmem>>, vector<4x1xf32>
    %cst_67 = arith.constant 0.000000e+00 : f32
    %167 = vector.shape_cast %165 : vector<1x256xi1> to vector<1x256xi1>
    %168 = vector.broadcast %167 : vector<1x256xi1> to vector<4x256xi1>
    %169 = vector.shape_cast %166 : vector<4x1xf32> to vector<4x1xf32>
    %170 = vector.broadcast %169 : vector<4x1xf32> to vector<4x256xf32>
    %171 = vector.broadcast %cst_67 : f32 to vector<4x256xf32>
    %172 = arith.select %168, %170, %171 : vector<4x256xi1>, vector<4x256xf32>
    %c1_i32_68 = arith.constant 1 : i32
    %173 = vector.broadcast %c1_i32_68 : i32 to vector<1x256xi32>
    %174 = arith.addi %40, %173 : vector<1x256xi32>
    %c0_i32_69 = arith.constant 0 : i32
    %175 = vector.broadcast %c0_i32_69 : i32 to vector<1x256xi32>
    %176 = arith.cmpi sge, %174, %175 : vector<1x256xi32>
    %c1_i32_70 = arith.constant 1 : i32
    %177 = vector.broadcast %c1_i32_70 : i32 to vector<1x256xi32>
    %178 = arith.addi %40, %177 : vector<1x256xi32>
    %c15_i32_71 = arith.constant 15 : i32
    %179 = vector.broadcast %c15_i32_71 : i32 to vector<1x256xi32>
    %180 = arith.cmpi sle, %178, %179 : vector<1x256xi32>
    %181 = arith.andi %176, %180 : vector<1x256xi1>
    %c0_i32_72 = arith.constant 0 : i32
    %182 = vector.broadcast %c0_i32_72 : i32 to vector<1x256xi32>
    %183 = arith.addi %42, %182 : vector<1x256xi32>
    %c0_i32_73 = arith.constant 0 : i32
    %184 = vector.broadcast %c0_i32_73 : i32 to vector<1x256xi32>
    %185 = arith.cmpi sge, %183, %184 : vector<1x256xi32>
    %186 = arith.andi %181, %185 : vector<1x256xi1>
    %c0_i32_74 = arith.constant 0 : i32
    %187 = vector.broadcast %c0_i32_74 : i32 to vector<1x256xi32>
    %188 = arith.addi %42, %187 : vector<1x256xi32>
    %c15_i32_75 = arith.constant 15 : i32
    %189 = vector.broadcast %c15_i32_75 : i32 to vector<1x256xi32>
    %190 = arith.cmpi sle, %188, %189 : vector<1x256xi32>
    %191 = arith.andi %186, %190 : vector<1x256xi1>
    %c0_76 = arith.constant 0 : index
    %c8 = arith.constant 8 : index
    %192 = vector.load %arg3[%c0_76, %c8] : memref<8x128xf32, #tpu.memory_space<vmem>>, vector<4x1xf32>
    %cst_77 = arith.constant 0.000000e+00 : f32
    %193 = vector.shape_cast %191 : vector<1x256xi1> to vector<1x256xi1>
    %194 = vector.broadcast %193 : vector<1x256xi1> to vector<4x256xi1>
    %195 = vector.shape_cast %192 : vector<4x1xf32> to vector<4x1xf32>
    %196 = vector.broadcast %195 : vector<4x1xf32> to vector<4x256xf32>
    %197 = vector.broadcast %cst_77 : f32 to vector<4x256xf32>
    %198 = arith.select %194, %196, %197 : vector<4x256xi1>, vector<4x256xf32>
    %c-1_i32_78 = arith.constant -1 : i32
    %199 = vector.broadcast %c-1_i32_78 : i32 to vector<1x256xi32>
    %200 = arith.addi %40, %199 : vector<1x256xi32>
    %c0_i32_79 = arith.constant 0 : i32
    %201 = vector.broadcast %c0_i32_79 : i32 to vector<1x256xi32>
    %202 = arith.cmpi sge, %200, %201 : vector<1x256xi32>
    %c-1_i32_80 = arith.constant -1 : i32
    %203 = vector.broadcast %c-1_i32_80 : i32 to vector<1x256xi32>
    %204 = arith.addi %40, %203 : vector<1x256xi32>
    %c15_i32_81 = arith.constant 15 : i32
    %205 = vector.broadcast %c15_i32_81 : i32 to vector<1x256xi32>
    %206 = arith.cmpi sle, %204, %205 : vector<1x256xi32>
    %207 = arith.andi %202, %206 : vector<1x256xi1>
    %c1_i32_82 = arith.constant 1 : i32
    %208 = vector.broadcast %c1_i32_82 : i32 to vector<1x256xi32>
    %209 = arith.addi %42, %208 : vector<1x256xi32>
    %c0_i32_83 = arith.constant 0 : i32
    %210 = vector.broadcast %c0_i32_83 : i32 to vector<1x256xi32>
    %211 = arith.cmpi sge, %209, %210 : vector<1x256xi32>
    %212 = arith.andi %207, %211 : vector<1x256xi1>
    %c1_i32_84 = arith.constant 1 : i32
    %213 = vector.broadcast %c1_i32_84 : i32 to vector<1x256xi32>
    %214 = arith.addi %42, %213 : vector<1x256xi32>
    %c15_i32_85 = arith.constant 15 : i32
    %215 = vector.broadcast %c15_i32_85 : i32 to vector<1x256xi32>
    %216 = arith.cmpi sle, %214, %215 : vector<1x256xi32>
    %217 = arith.andi %212, %216 : vector<1x256xi1>
    %c0_86 = arith.constant 0 : index
    %c9 = arith.constant 9 : index
    %218 = vector.load %arg3[%c0_86, %c9] : memref<8x128xf32, #tpu.memory_space<vmem>>, vector<4x1xf32>
    %cst_87 = arith.constant 0.000000e+00 : f32
    %219 = vector.shape_cast %217 : vector<1x256xi1> to vector<1x256xi1>
    %220 = vector.broadcast %219 : vector<1x256xi1> to vector<4x256xi1>
    %221 = vector.shape_cast %218 : vector<4x1xf32> to vector<4x1xf32>
    %222 = vector.broadcast %221 : vector<4x1xf32> to vector<4x256xf32>
    %223 = vector.broadcast %cst_87 : f32 to vector<4x256xf32>
    %224 = arith.select %220, %222, %223 : vector<4x256xi1>, vector<4x256xf32>
    %c0_i32_88 = arith.constant 0 : i32
    %225 = vector.broadcast %c0_i32_88 : i32 to vector<1x256xi32>
    %226 = arith.addi %40, %225 : vector<1x256xi32>
    %c0_i32_89 = arith.constant 0 : i32
    %227 = vector.broadcast %c0_i32_89 : i32 to vector<1x256xi32>
    %228 = arith.cmpi sge, %226, %227 : vector<1x256xi32>
    %c0_i32_90 = arith.constant 0 : i32
    %229 = vector.broadcast %c0_i32_90 : i32 to vector<1x256xi32>
    %230 = arith.addi %40, %229 : vector<1x256xi32>
    %c15_i32_91 = arith.constant 15 : i32
    %231 = vector.broadcast %c15_i32_91 : i32 to vector<1x256xi32>
    %232 = arith.cmpi sle, %230, %231 : vector<1x256xi32>
    %233 = arith.andi %228, %232 : vector<1x256xi1>
    %c1_i32_92 = arith.constant 1 : i32
    %234 = vector.broadcast %c1_i32_92 : i32 to vector<1x256xi32>
    %235 = arith.addi %42, %234 : vector<1x256xi32>
    %c0_i32_93 = arith.constant 0 : i32
    %236 = vector.broadcast %c0_i32_93 : i32 to vector<1x256xi32>
    %237 = arith.cmpi sge, %235, %236 : vector<1x256xi32>
    %238 = arith.andi %233, %237 : vector<1x256xi1>
    %c1_i32_94 = arith.constant 1 : i32
    %239 = vector.broadcast %c1_i32_94 : i32 to vector<1x256xi32>
    %240 = arith.addi %42, %239 : vector<1x256xi32>
    %c15_i32_95 = arith.constant 15 : i32
    %241 = vector.broadcast %c15_i32_95 : i32 to vector<1x256xi32>
    %242 = arith.cmpi sle, %240, %241 : vector<1x256xi32>
    %243 = arith.andi %238, %242 : vector<1x256xi1>
    %c0_96 = arith.constant 0 : index
    %c10 = arith.constant 10 : index
    %244 = vector.load %arg3[%c0_96, %c10] : memref<8x128xf32, #tpu.memory_space<vmem>>, vector<4x1xf32>
    %cst_97 = arith.constant 0.000000e+00 : f32
    %245 = vector.shape_cast %243 : vector<1x256xi1> to vector<1x256xi1>
    %246 = vector.broadcast %245 : vector<1x256xi1> to vector<4x256xi1>
    %247 = vector.shape_cast %244 : vector<4x1xf32> to vector<4x1xf32>
    %248 = vector.broadcast %247 : vector<4x1xf32> to vector<4x256xf32>
    %249 = vector.broadcast %cst_97 : f32 to vector<4x256xf32>
    %250 = arith.select %246, %248, %249 : vector<4x256xi1>, vector<4x256xf32>
    %c1_i32_98 = arith.constant 1 : i32
    %251 = vector.broadcast %c1_i32_98 : i32 to vector<1x256xi32>
    %252 = arith.addi %40, %251 : vector<1x256xi32>
    %c0_i32_99 = arith.constant 0 : i32
    %253 = vector.broadcast %c0_i32_99 : i32 to vector<1x256xi32>
    %254 = arith.cmpi sge, %252, %253 : vector<1x256xi32>
    %c1_i32_100 = arith.constant 1 : i32
    %255 = vector.broadcast %c1_i32_100 : i32 to vector<1x256xi32>
    %256 = arith.addi %40, %255 : vector<1x256xi32>
    %c15_i32_101 = arith.constant 15 : i32
    %257 = vector.broadcast %c15_i32_101 : i32 to vector<1x256xi32>
    %258 = arith.cmpi sle, %256, %257 : vector<1x256xi32>
    %259 = arith.andi %254, %258 : vector<1x256xi1>
    %c1_i32_102 = arith.constant 1 : i32
    %260 = vector.broadcast %c1_i32_102 : i32 to vector<1x256xi32>
    %261 = arith.addi %42, %260 : vector<1x256xi32>
    %c0_i32_103 = arith.constant 0 : i32
    %262 = vector.broadcast %c0_i32_103 : i32 to vector<1x256xi32>
    %263 = arith.cmpi sge, %261, %262 : vector<1x256xi32>
    %264 = arith.andi %259, %263 : vector<1x256xi1>
    %c1_i32_104 = arith.constant 1 : i32
    %265 = vector.broadcast %c1_i32_104 : i32 to vector<1x256xi32>
    %266 = arith.addi %42, %265 : vector<1x256xi32>
    %c15_i32_105 = arith.constant 15 : i32
    %267 = vector.broadcast %c15_i32_105 : i32 to vector<1x256xi32>
    %268 = arith.cmpi sle, %266, %267 : vector<1x256xi32>
    %269 = arith.andi %264, %268 : vector<1x256xi1>
    %c0_106 = arith.constant 0 : index
    %c11 = arith.constant 11 : index
    %270 = vector.load %arg3[%c0_106, %c11] : memref<8x128xf32, #tpu.memory_space<vmem>>, vector<4x1xf32>
    %cst_107 = arith.constant 0.000000e+00 : f32
    %271 = vector.shape_cast %269 : vector<1x256xi1> to vector<1x256xi1>
    %272 = vector.broadcast %271 : vector<1x256xi1> to vector<4x256xi1>
    %273 = vector.shape_cast %270 : vector<4x1xf32> to vector<4x1xf32>
    %274 = vector.broadcast %273 : vector<4x1xf32> to vector<4x256xf32>
    %275 = vector.broadcast %cst_107 : f32 to vector<4x256xf32>
    %276 = arith.select %272, %274, %275 : vector<4x256xi1>, vector<4x256xf32>
    %277 = vector.broadcast %35 : vector<4x1xf32> to vector<4x256xf32>
    %278 = arith.mulf %8, %277 : vector<4x256xf32>
    %279 = vector.broadcast %37 : vector<4x1xf32> to vector<4x256xf32>
    %280 = arith.addf %278, %279 : vector<4x256xf32>
    %cst_108 = arith.constant 0.000000e+00 : f32
    %281 = vector.broadcast %cst_108 : f32 to vector<4x256xf32>
    %282 = arith.maximumf %280, %281 : vector<4x256xf32>
    %283 = arith.mulf %282, %172 : vector<4x256xf32>
    %c17_i32 = arith.constant 17 : i32
    %284 = tpu.dynamic_rotate %282 by %c17_i32 dim 1 : vector<4x256xf32>, i32 -> vector<4x256xf32>
    %285 = arith.mulf %284, %68 : vector<4x256xf32>
    %286 = arith.addf %283, %285 : vector<4x256xf32>
    %c16_i32 = arith.constant 16 : i32
    %287 = tpu.dynamic_rotate %282 by %c16_i32 dim 1 : vector<4x256xf32>, i32 -> vector<4x256xf32>
    %288 = arith.mulf %287, %94 : vector<4x256xf32>
    %289 = arith.addf %286, %288 : vector<4x256xf32>
    %c15_i32_109 = arith.constant 15 : i32
    %290 = tpu.dynamic_rotate %282 by %c15_i32_109 dim 1 : vector<4x256xf32>, i32 -> vector<4x256xf32>
    %291 = arith.mulf %290, %120 : vector<4x256xf32>
    %292 = arith.addf %289, %291 : vector<4x256xf32>
    %c1_i32_110 = arith.constant 1 : i32
    %293 = tpu.dynamic_rotate %282 by %c1_i32_110 dim 1 : vector<4x256xf32>, i32 -> vector<4x256xf32>
    %294 = arith.mulf %293, %146 : vector<4x256xf32>
    %295 = arith.addf %292, %294 : vector<4x256xf32>
    %c255_i32 = arith.constant 255 : i32
    %296 = tpu.dynamic_rotate %282 by %c255_i32 dim 1 : vector<4x256xf32>, i32 -> vector<4x256xf32>
    %297 = arith.mulf %296, %198 : vector<4x256xf32>
    %298 = arith.addf %295, %297 : vector<4x256xf32>
    %c241_i32 = arith.constant 241 : i32
    %299 = tpu.dynamic_rotate %282 by %c241_i32 dim 1 : vector<4x256xf32>, i32 -> vector<4x256xf32>
    %300 = arith.mulf %299, %224 : vector<4x256xf32>
    %301 = arith.addf %298, %300 : vector<4x256xf32>
    %c240_i32 = arith.constant 240 : i32
    %302 = tpu.dynamic_rotate %282 by %c240_i32 dim 1 : vector<4x256xf32>, i32 -> vector<4x256xf32>
    %303 = arith.mulf %302, %250 : vector<4x256xf32>
    %304 = arith.addf %301, %303 : vector<4x256xf32>
    %c239_i32 = arith.constant 239 : i32
    %305 = tpu.dynamic_rotate %282 by %c239_i32 dim 1 : vector<4x256xf32>, i32 -> vector<4x256xf32>
    %306 = arith.mulf %305, %276 : vector<4x256xf32>
    %307 = arith.addf %304, %306 : vector<4x256xf32>
    %cst_111 = arith.constant dense<0.000000e+00> : vector<256xf32>
    %308 = vector.multi_reduction <add>, %307, %cst_111 [0] : vector<4x256xf32> to vector<256xf32>
    %309 = vector.shape_cast %308 : vector<256xf32> to vector<1x256xf32>
    %310 = vector.broadcast %3 : vector<1x1xf32> to vector<1x256xf32>
    %311 = arith.addf %309, %310 : vector<1x256xf32>
    %312 = arith.negf %311 : vector<1x256xf32>
    %313 = math.exp %312 : vector<1x256xf32>
    %cst_112 = arith.constant 1.000000e+00 : f32
    %314 = vector.broadcast %cst_112 : f32 to vector<1x256xf32>
    %315 = arith.addf %314, %313 : vector<1x256xf32>
    %316 = arith.divf %314, %315 : vector<1x256xf32>
    %317 = vector.broadcast %316 : vector<1x256xf32> to vector<32x256xf32>
    %318 = arith.mulf %7, %317 : vector<32x256xf32>
    %c0_113 = arith.constant 0 : index
    %c0_114 = arith.constant 0 : index
    %c0_115 = arith.constant 0 : index
    %319 = vector.load %arg4[%c0_113, %c0_114, %c0_115] : memref<2x32x256xf32, #tpu.memory_space<vmem>>, vector<1x32x256xf32>
    %320 = vector.shape_cast %319 : vector<1x32x256xf32> to vector<32x256xf32>
    %321 = vector.shape_cast %318 : vector<32x256xf32> to vector<1x32x256xf32>
    tpu.vector_store %arg4[%c0_113, %c0_114, %c0_115], %321 {strides = array<i32>} : memref<2x32x256xf32, #tpu.memory_space<vmem>>, vector<1x32x256xf32>,
    %322 = vector.broadcast %35 : vector<4x1xf32> to vector<4x256xf32>
    %323 = arith.mulf %18, %322 : vector<4x256xf32>
    %324 = vector.broadcast %37 : vector<4x1xf32> to vector<4x256xf32>
    %325 = arith.addf %323, %324 : vector<4x256xf32>
    %cst_116 = arith.constant 0.000000e+00 : f32
    %326 = vector.broadcast %cst_116 : f32 to vector<4x256xf32>
    %327 = arith.maximumf %325, %326 : vector<4x256xf32>
    %328 = arith.mulf %327, %172 : vector<4x256xf32>
    %c17_i32_117 = arith.constant 17 : i32
    %329 = tpu.dynamic_rotate %327 by %c17_i32_117 dim 1 : vector<4x256xf32>, i32 -> vector<4x256xf32>
    %330 = arith.mulf %329, %68 : vector<4x256xf32>
    %331 = arith.addf %328, %330 : vector<4x256xf32>
    %c16_i32_118 = arith.constant 16 : i32
    %332 = tpu.dynamic_rotate %327 by %c16_i32_118 dim 1 : vector<4x256xf32>, i32 -> vector<4x256xf32>
    %333 = arith.mulf %332, %94 : vector<4x256xf32>
    %334 = arith.addf %331, %333 : vector<4x256xf32>
    %c15_i32_119 = arith.constant 15 : i32
    %335 = tpu.dynamic_rotate %327 by %c15_i32_119 dim 1 : vector<4x256xf32>, i32 -> vector<4x256xf32>
    %336 = arith.mulf %335, %120 : vector<4x256xf32>
    %337 = arith.addf %334, %336 : vector<4x256xf32>
    %c1_i32_120 = arith.constant 1 : i32
    %338 = tpu.dynamic_rotate %327 by %c1_i32_120 dim 1 : vector<4x256xf32>, i32 -> vector<4x256xf32>
    %339 = arith.mulf %338, %146 : vector<4x256xf32>
    %340 = arith.addf %337, %339 : vector<4x256xf32>
    %c255_i32_121 = arith.constant 255 : i32
    %341 = tpu.dynamic_rotate %327 by %c255_i32_121 dim 1 : vector<4x256xf32>, i32 -> vector<4x256xf32>
    %342 = arith.mulf %341, %198 : vector<4x256xf32>
    %343 = arith.addf %340, %342 : vector<4x256xf32>
    %c241_i32_122 = arith.constant 241 : i32
    %344 = tpu.dynamic_rotate %327 by %c241_i32_122 dim 1 : vector<4x256xf32>, i32 -> vector<4x256xf32>
    %345 = arith.mulf %344, %224 : vector<4x256xf32>
    %346 = arith.addf %343, %345 : vector<4x256xf32>
    %c240_i32_123 = arith.constant 240 : i32
    %347 = tpu.dynamic_rotate %327 by %c240_i32_123 dim 1 : vector<4x256xf32>, i32 -> vector<4x256xf32>
    %348 = arith.mulf %347, %250 : vector<4x256xf32>
    %349 = arith.addf %346, %348 : vector<4x256xf32>
    %c239_i32_124 = arith.constant 239 : i32
    %350 = tpu.dynamic_rotate %327 by %c239_i32_124 dim 1 : vector<4x256xf32>, i32 -> vector<4x256xf32>
    %351 = arith.mulf %350, %276 : vector<4x256xf32>
    %352 = arith.addf %349, %351 : vector<4x256xf32>
    %cst_125 = arith.constant dense<0.000000e+00> : vector<256xf32>
    %353 = vector.multi_reduction <add>, %352, %cst_125 [0] : vector<4x256xf32> to vector<256xf32>
    %354 = vector.shape_cast %353 : vector<256xf32> to vector<1x256xf32>
    %355 = vector.broadcast %3 : vector<1x1xf32> to vector<1x256xf32>
    %356 = arith.addf %354, %355 : vector<1x256xf32>
    %357 = arith.negf %356 : vector<1x256xf32>
    %358 = math.exp %357 : vector<1x256xf32>
    %cst_126 = arith.constant 1.000000e+00 : f32
    %359 = vector.broadcast %cst_126 : f32 to vector<1x256xf32>
    %360 = arith.addf %359, %358 : vector<1x256xf32>
    %361 = arith.divf %359, %360 : vector<1x256xf32>
    %362 = vector.broadcast %361 : vector<1x256xf32> to vector<32x256xf32>
    %363 = arith.mulf %17, %362 : vector<32x256xf32>
    %c1_127 = arith.constant 1 : index
    %c0_128 = arith.constant 0 : index
    %c0_129 = arith.constant 0 : index
    %364 = vector.load %arg4[%c1_127, %c0_128, %c0_129] : memref<2x32x256xf32, #tpu.memory_space<vmem>>, vector<1x32x256xf32>
    %365 = vector.shape_cast %364 : vector<1x32x256xf32> to vector<32x256xf32>
    %366 = vector.shape_cast %363 : vector<32x256xf32> to vector<1x32x256xf32>
    tpu.vector_store %arg4[%c1_127, %c0_128, %c0_129], %366 {strides = array<i32>} : memref<2x32x256xf32, #tpu.memory_space<vmem>>, vector<1x32x256xf32>,
    return
  }
  func.func @transform_0(%arg0: i32) -> (i32, i32, i32) {
    %c0_i32 = arith.constant 0 : i32
    %c0_i32_0 = arith.constant 0 : i32
    %c0_i32_1 = arith.constant 0 : i32
    %c0_i32_2 = arith.constant 0 : i32
    return %c0_i32, %c0_i32_0, %c0_i32_1 : i32, i32, i32
  }
  func.func @transform_1(%arg0: i32) -> (i32, i32) {
    %c0_i32 = arith.constant 0 : i32
    %c0_i32_0 = arith.constant 0 : i32
    %c0_i32_1 = arith.constant 0 : i32
    return %c0_i32, %c0_i32_0 : i32, i32
  }
  func.func @transform_2(%arg0: i32) -> (i32, i32) {
    %c0_i32 = arith.constant 0 : i32
    %c0_i32_0 = arith.constant 0 : i32
    %c0_i32_1 = arith.constant 0 : i32
    return %c0_i32, %c0_i32_0 : i32, i32
  }
  func.func @transform_3(%arg0: i32) -> (i32, i32, i32) {
    %c0_i32 = arith.constant 0 : i32
    %c0_i32_0 = arith.constant 0 : i32
    %c0_i32_1 = arith.constant 0 : i32
    %c0_i32_2 = arith.constant 0 : i32
    return %c0_i32, %c0_i32_0, %c0_i32_1 : i32, i32, i32
  }
}

</mosaic_0001>

<llo_original>
// kernel: tpu_custom_call.1
$region0: #{tpu_custom_call.1}
  #allocation0 [shape = 'u32[]', space=smem, size = 0x4, offset = 0x4, fixed_abs, tag = 'smem constant byte address 0x4 - core index']
  #allocation1 [shape = 'u32[144,128]{1,0:T(1,128)}', space=vmem, size = 0x12000, scoped, tag = 'internal scratch']
  %s0 = inlined_call_operand.hbm [shape: f32[2,32,256], index: 0, kind: input, shape index: {}]
  %s1 = inlined_call_operand.hbm [shape: f32[4,32], index: 1, kind: input, shape index: {}]
  %s2 = inlined_call_operand.hbm [shape: f32[8,128], index: 2, kind: input, shape index: {}]
  %s3 = inlined_call_operand.hbm [shape: f32[2,32,256], index: 3, kind: output, shape index: {}]
  %s4 = sld [smem:[#allocation0]]
  $region34: #{tpu_custom_call.1} parent=0
    _
  %s6 = ssub.s32 1, %s4
  %s7 = scalar_select 0, %s6, %s4
  $region1: #{tpu_custom_call.1} parent=0
    #allocation2 [shape = 'u8[65536]{0}', space=vmem, size = 0x10000, scoped, tag = 'input window, operand 0, single buffered']
    #allocation3 [shape = 's32[1]{0}', space=sflag, size = 0x4, scoped, tag = 'scoped memory for tpu_custom_call.1']
    #allocation4 [shape = 's32[1]{0}', space=sflag, size = 0x4, scoped, tag = 'scoped memory for tpu_custom_call.1']
    #allocation5 [shape = 'u8[2048]{0}', space=vmem, size = 0x800, scoped, tag = 'input window, operand 1, single buffered']
    #allocation6 [shape = 's32[1]{0}', space=sflag, size = 0x4, scoped, tag = 'scoped memory for tpu_custom_call.1']
    #allocation7 [shape = 'u8[4096]{0}', space=vmem, size = 0x1000, scoped, tag = 'input window, operand 2, single buffered']
    #allocation8 [shape = 'u8[65536]{0}', space=vmem, size = 0x10000, scoped, tag = 'output window, operand 0, single buffered']
    %8 = vsyncpa [#allocation3], 0
    %9 = vsyncpa [#allocation6], 0
    %10 = vsyncpa [#allocation4], 0
    // Predicated region
    $region2: #{tpu_custom_call.1} parent=1 // pred_check
      _
    $region3: #{tpu_custom_call.1} parent=1 // pred_check_branch
      %12 = sbr.rel (0) target = $region5
    $region4: #{tpu_custom_call.1} parent=1 // pred_region
      %s14 = ssub.s32 2048, 2048
      %15 = vsyncadd [#allocation3], %s14
      %s16 = sshll.u32 [#allocation2], 4
      %s17 = int_to_ptr.vmem [resolvable:$true] %s16
      %22 = dma.hbm_to_vmem [thread:$0]  %s0, 2048, %s17, [#allocation3], 256, 256, 16
    $region5: #{tpu_custom_call.1} parent=1 // pred_fallthru
      _
    // Predicated region
    $region6: #{tpu_custom_call.1} parent=1 // pred_check
      _
    $region7: #{tpu_custom_call.1} parent=1 // pred_check_branch
      %24 = sbr.rel (0) target = $region9
    $region8: #{tpu_custom_call.1} parent=1 // pred_region
      %s26 = ssub.s32 64, 64
      %27 = vsyncadd [#allocation6], %s26
      %s29 = sshll.u32 [#allocation5], 4
      %s30 = int_to_ptr.vmem [resolvable:$true] %s29
      %32 = dma.hbm_to_vmem [thread:$0]  %s1, 64, %s30, [#allocation6]
    $region9: #{tpu_custom_call.1} parent=1 // pred_fallthru
      _
    // Predicated region
    $region10: #{tpu_custom_call.1} parent=1 // pred_check
      _
    $region11: #{tpu_custom_call.1} parent=1 // pred_check_branch
      %34 = sbr.rel (0) target = $region13
    $region12: #{tpu_custom_call.1} parent=1 // pred_region
      %s36 = ssub.s32 128, 128
      %37 = vsyncadd [#allocation6], %s36
      %s39 = sshll.u32 [#allocation7], 4
      %s40 = int_to_ptr.vmem [resolvable:$true] %s39
      %42 = dma.hbm_to_vmem [thread:$0]  %s2, 128, %s40, [#allocation6]
    $region13: #{tpu_custom_call.1} parent=1 // pred_fallthru
      _
    // Predicated region
    $region14: #{tpu_custom_call.1} parent=1 // pred_check
      _
    $region15: #{tpu_custom_call.1} parent=1 // pred_check_branch
      %44 = sbr.rel (0) target = $region17
    $region16: #{tpu_custom_call.1} parent=1 // pred_region
      %45 = dma.done [#allocation3], 2048
    $region17: #{tpu_custom_call.1} parent=1 // pred_fallthru
      _
    // Predicated region
    $region18: #{tpu_custom_call.1} parent=1 // pred_check
      _
    $region19: #{tpu_custom_call.1} parent=1 // pred_check_branch
      %47 = sbr.rel (0) target = $region21
    $region20: #{tpu_custom_call.1} parent=1 // pred_region
      %48 = dma.done [#allocation6], 64
    $region21: #{tpu_custom_call.1} parent=1 // pred_fallthru
      _
    // Predicated region
    $region22: #{tpu_custom_call.1} parent=1 // pred_check
      _
    $region23: #{tpu_custom_call.1} parent=1 // pred_check_branch
      %50 = sbr.rel (0) target = $region25
    $region24: #{tpu_custom_call.1} parent=1 // pred_region
      %51 = dma.done [#allocation6], 128
    $region25: #{tpu_custom_call.1} parent=1 // pred_fallthru
      _
    %v52 = vld [vmem:[#allocation5] sm:$0xf]
    %v53 = vld [vmem:[#allocation7] sm:$0xf]
    %v54 = vld [vmem:[#allocation7] sm:$0x1]
    %v55 = vld [vmem:[#allocation2] sm:$0xff]
    %v56 = vld [vmem:[#allocation2 + $0x8] sm:$0xff]
    %v57 = vld [vmem:[#allocation2 + $0x10] sm:$0xff]
    %v58 = vld [vmem:[#allocation2 + $0x18] sm:$0xff]
    %v59 = vld [vmem:[#allocation2 + $0x20] sm:$0xff]
    %v60 = vld [vmem:[#allocation2 + $0x28] sm:$0xff]
    %v61 = vld [vmem:[#allocation2 + $0x30] sm:$0xff]
    %v62 = vld [vmem:[#allocation2 + $0x38] sm:$0xff]
    %vm63 = vcmask 261120
    %v65 = vsel %vm63, %v52, 0
    %67 = vmatprep.subr.mxu0 %v56
    %68 = vmatpush1.msra.mxu0 %v55
    %69 = vmatprep.subr.mxu0 %v58
    %70 = vmatpush1.msra.mxu0 %v57
    %71 = vmatprep.subr.mxu0 %v60
    %72 = vmatpush1.msra.mxu0 %v59
    %73 = vmatprep.subr.mxu0 %v62
    %74 = vmatpush1.msra.mxu0 %v61
    %75 = vmatprep.subr.mxu0 0.0
    %76 = vmatpush1.msra.mxu0 0.0
    %77 = vmatprep.subr.mxu0 0.0
    %78 = vmatpush1.msra.mxu0 0.0
    %79 = vmatprep.subr.mxu0 0.0
    %80 = vmatpush1.msra.mxu0 0.0
    %81 = vmatprep.subr.mxu0 0.0
    %82 = vmatpush1.msra.mxu0 0.0
    %83 = vmatprep.subr.mxu0 0.0
    %84 = vmatpush1.msra.mxu0 0.0
    %85 = vmatprep.subr.mxu0 0.0
    %86 = vmatpush1.msra.mxu0 0.0
    %87 = vmatprep.subr.mxu0 0.0
    %88 = vmatpush1.msra.mxu0 0.0
    %89 = vmatprep.subr.mxu0 0.0
    %90 = vmatpush1.msra.mxu0 0.0
    %91 = vmatprep.subr.mxu0 0.0
    %92 = vmatpush1.msra.mxu0 0.0
    %93 = vmatprep.subr.mxu0 0.0
    %94 = vmatpush1.msra.mxu0 0.0
    %95 = vmatprep.subr.mxu0 0.0
    %96 = vmatpush1.msra.mxu0 0.0
    %97 = vmatprep.subr.mxu0 0.0
    %98 = vmatpush1.msra.mxu0 0.0
    %99 = vmatprep.subr.mxu0 0.0
    %100 = vmatpush1.msra.mxu0 0.0
    %101 = vmatprep.subr.mxu0 0.0
    %102 = vmatpush1.msra.mxu0 0.0
    %103 = vmatprep.subr.mxu0 0.0
    %104 = vmatpush1.msra.mxu0 0.0
    %105 = vmatprep.subr.mxu0 0.0
    %106 = vmatpush1.msra.mxu0 0.0
    %107 = vmatprep.subr.mxu0 0.0
    %108 = vmatpush1.msra.mxu0 0.0
    %109 = vmatprep.subr.mxu0 0.0
    %110 = vmatpush1.msra.mxu0 0.0
    %111 = vmatprep.subr.mxu0 0.0
    %112 = vmatpush1.msra.mxu0 0.0
    %113 = vmatprep.subr.mxu0 0.0
    %114 = vmatpush1.msra.mxu0 0.0
    %115 = vmatprep.subr.mxu0 0.0
    %116 = vmatpush1.msra.mxu0 0.0
    %117 = vmatprep.subr.mxu0 0.0
    %118 = vmatpush1.msra.mxu0 0.0
    %119 = vmatprep.subr.mxu0 0.0
    %120 = vmatpush1.msra.mxu0 0.0
    %121 = vmatprep.subr.mxu0 0.0
    %122 = vmatpush1.msra.mxu0 0.0
    %123 = vmatprep.subr.mxu0 0.0
    %124 = vmatpush1.msra.mxu0 0.0
    %125 = vmatprep.subr.mxu0 0.0
    %126 = vmatpush1.msra.mxu0 0.0
    %127 = vmatprep.subr.mxu0 0.0
    %128 = vmatpush1.msra.mxu0 0.0
    %129 = vmatprep.subr.mxu0 0.0
    %130 = vmatpush1.msra.mxu0 0.0
    %131 = vmatprep.mubr.f32.mxu0 0.0
    %132 = vmatmul.mubr.f32.gmra.mrb[0].mxu0 %v65
    %v133 = vpop.f32.mrb[0].mxu0
    %v134 = vadd.f32 0.0, %v133
    %v135 = vpop.f32.mrb[0].mxu0
    %v136 = vadd.f32 0.0, %v135
    %137 = vdwg.mxu0
    %vm138 = vcmask 1043456
    %v139 = vsel %vm138, %v134, 0.0
    %v140 = vsel %vm138, %v136, 0.0
    %v141 = vadd.f32 %v139, %v140
    %142 = vadd.xlane.f32.xlu0 %v141
    %v143 = vpop.xlane.xlu0 %142
    %v144 = vadd.f32 %v143, 0.0
    %v145 = vmul.f32 %v134, %v134
    %v146 = vmul.f32 %v136, %v136
    %v147 = vsel %vm138, %v145, 0.0
    %v148 = vsel %vm138, %v146, 0.0
    %v149 = vadd.f32 %v147, %v148
    %150 = vadd.xlane.f32.xlu0 %v149
    %v151 = vpop.xlane.xlu0 %150
    %v152 = vadd.f32 %v151, 0.0
    %s153 = scalar_lea.vmem [#allocation2], 64
    %v154 = vld [vmem:[%s153] sm:$0xff]
    %v155 = vld [vmem:[%s153 + $0x8] sm:$0xff]
    %v156 = vld [vmem:[%s153 + $0x10] sm:$0xff]
    %v157 = vld [vmem:[%s153 + $0x18] sm:$0xff]
    %v158 = vld [vmem:[%s153 + $0x20] sm:$0xff]
    %v159 = vld [vmem:[%s153 + $0x28] sm:$0xff]
    %v160 = vld [vmem:[%s153 + $0x30] sm:$0xff]
    %v161 = vld [vmem:[%s153 + $0x38] sm:$0xff]
    %162 = vmatprep.subr.mxu0 %v155
    %163 = vmatpush1.msra.mxu0 %v154
    %164 = vmatprep.subr.mxu0 %v157
    %165 = vmatpush1.msra.mxu0 %v156
    %166 = vmatprep.subr.mxu0 %v159
    %167 = vmatpush1.msra.mxu0 %v158
    %168 = vmatprep.subr.mxu0 %v161
    %169 = vmatpush1.msra.mxu0 %v160
    %170 = vmatprep.subr.mxu0 0.0
    %171 = vmatpush1.msra.mxu0 0.0
    %172 = vmatprep.subr.mxu0 0.0
    %173 = vmatpush1.msra.mxu0 0.0
    %174 = vmatprep.subr.mxu0 0.0
    %175 = vmatpush1.msra.mxu0 0.0
    %176 = vmatprep.subr.mxu0 0.0
    %177 = vmatpush1.msra.mxu0 0.0
    %178 = vmatprep.subr.mxu0 0.0
    %179 = vmatpush1.msra.mxu0 0.0
    %180 = vmatprep.subr.mxu0 0.0
    %181 = vmatpush1.msra.mxu0 0.0
    %182 = vmatprep.subr.mxu0 0.0
    %183 = vmatpush1.msra.mxu0 0.0
    %184 = vmatprep.subr.mxu0 0.0
    %185 = vmatpush1.msra.mxu0 0.0
    %186 = vmatprep.subr.mxu0 0.0
    %187 = vmatpush1.msra.mxu0 0.0
    %188 = vmatprep.subr.mxu0 0.0
    %189 = vmatpush1.msra.mxu0 0.0
    %190 = vmatprep.subr.mxu0 0.0
    %191 = vmatpush1.msra.mxu0 0.0
    %192 = vmatprep.subr.mxu0 0.0
    %193 = vmatpush1.msra.mxu0 0.0
    %194 = vmatprep.subr.mxu0 0.0
    %195 = vmatpush1.msra.mxu0 0.0
    %196 = vmatprep.subr.mxu0 0.0
    %197 = vmatpush1.msra.mxu0 0.0
    %198 = vmatprep.subr.mxu0 0.0
    %199 = vmatpush1.msra.mxu0 0.0
    %200 = vmatprep.subr.mxu0 0.0
    %201 = vmatpush1.msra.mxu0 0.0
    %202 = vmatprep.subr.mxu0 0.0
    %203 = vmatpush1.msra.mxu0 0.0
    %204 = vmatprep.subr.mxu0 0.0
    %205 = vmatpush1.msra.mxu0 0.0
    %206 = vmatprep.subr.mxu0 0.0
    %207 = vmatpush1.msra.mxu0 0.0
    %208 = vmatprep.subr.mxu0 0.0
    %209 = vmatpush1.msra.mxu0 0.0
    %210 = vmatprep.subr.mxu0 0.0
    %211 = vmatpush1.msra.mxu0 0.0
    %212 = vmatprep.subr.mxu0 0.0
    %213 = vmatpush1.msra.mxu0 0.0
    %214 = vmatprep.subr.mxu0 0.0
    %215 = vmatpush1.msra.mxu0 0.0
    %216 = vmatprep.subr.mxu0 0.0
    %217 = vmatpush1.msra.mxu0 0.0
    %218 = vmatprep.subr.mxu0 0.0
    %219 = vmatpush1.msra.mxu0 0.0
    %220 = vmatprep.subr.mxu0 0.0
    %221 = vmatpush1.msra.mxu0 0.0
    %222 = vmatprep.subr.mxu0 0.0
    %223 = vmatpush1.msra.mxu0 0.0
    %224 = vmatprep.subr.mxu0 0.0
    %225 = vmatpush1.msra.mxu0 0.0
    %226 = vmatprep.mubr.f32.mxu0 0.0
    %227 = vmatmul.mubr.f32.gmra.mrb[0].mxu0 %v65
    %v228 = vpop.f32.mrb[0].mxu0
    %v229 = vadd.f32 0.0, %v228
    %v230 = vpop.f32.mrb[0].mxu0
    %v231 = vadd.f32 0.0, %v230
    %232 = vdwg.mxu0
    %v233 = vsel %vm138, %v229, 0.0
    %v234 = vsel %vm138, %v231, 0.0
    %v235 = vadd.f32 %v233, %v234
    %236 = vadd.xlane.f32.xlu0 %v235
    %v237 = vpop.xlane.xlu0 %236
    %v238 = vadd.f32 %v144, %v237
    %v239 = vmul.f32 %v229, %v229
    %v240 = vmul.f32 %v231, %v231
    %v241 = vsel %vm138, %v239, 0.0
    %v242 = vsel %vm138, %v240, 0.0
    %v243 = vadd.f32 %v241, %v242
    %244 = vadd.xlane.f32.xlu0 %v243
    %v245 = vpop.xlane.xlu0 %244
    %v246 = vadd.f32 %v152, %v245
    %v247 = vmul.f32 %v238, 0.001953125
    %v248 = vmul.f32 %v246, 0.001953125
    %v249 = vmul.f32 %v247, %v247
    %v250 = vsub.f32 %v248, %v249
    %v251 = vadd.f32 %v250, 1e-05
    %v252 = vrsqrt.pop %v251
    %v253 = vmul.f32 %v53, %v252
    %v254 = vmul.f32 %v247, %v253
    %256 = vrot.lane.b32.xlu0 %v254, 1
    %v257 = vpop.permute.xlu0 %256
    %v259 = vsub.f32 %v53, %v257
    %v260 = vlaneseq
    %v261 = vand.u32 %v260, 127
    %v262 = vadd.s32 %v261, 128
    %v263 = vand.u32 %v261, 15
    %v264 = vand.u32 %v262, 15
    %v265 = vshra.s32 %v261, 4
    %v266 = vshra.s32 %v262, 4
    %v267 = vadd.s32 %v263, 4294967295
    %v268 = vadd.s32 %v264, 4294967295
    %vm269 = vcmp.ge.s32.totalorder %v267, 0
    %vm270 = vcmp.ge.s32.totalorder %v268, 0
    %vm271 = vcmp.le.s32.totalorder %v267, 15
    %vm272 = vcmp.le.s32.totalorder %v268, 15
    %vm273 = vmand %vm269, %vm271
    %vm274 = vmand %vm270, %vm272
    %v275 = vadd.s32 %v265, 4294967295
    %v276 = vadd.s32 %v266, 4294967295
    %vm277 = vcmp.ge.s32.totalorder %v275, 0
    %vm278 = vcmp.ge.s32.totalorder %v276, 0
    %vm279 = vmand %vm273, %vm277
    %vm280 = vmand %vm274, %vm278
    %vm281 = vcmp.le.s32.totalorder %v275, 15
    %vm282 = vcmp.le.s32.totalorder %v276, 15
    %vm283 = vmand %vm279, %vm281
    %vm284 = vmand %vm280, %vm282
    %v285 = vsel %vm283, 1, 0
    %v286 = vsel %vm284, 1, 0
    %vm287 = vcmp.eq.s32.totalorder %v285, 1
    %vm288 = vcmp.eq.s32.totalorder %v286, 1
    %290 = vset.pattern.permute.xlu0 3
    %291 = vperm.xlu0 %290, %v53
    %v292 = vpop.permute.xlu0 %291
    %v294 = vsel %vm287, %v292, 0.0
    %v295 = vsel %vm288, %v292, 0.0
    %vm296 = vcmp.ge.s32.totalorder %v263, 0
    %vm297 = vcmp.ge.s32.totalorder %v264, 0
    %vm298 = vcmp.le.s32.totalorder %v263, 15
    %vm299 = vcmp.le.s32.totalorder %v264, 15
    %vm300 = vmand %vm296, %vm298
    %vm301 = vmand %vm297, %vm299
    %vm302 = vmand %vm300, %vm277
    %vm303 = vmand %vm301, %vm278
    %vm304 = vmand %vm302, %vm281
    %vm305 = vmand %vm303, %vm282
    %v306 = vsel %vm304, 1, 0
    %v307 = vsel %vm305, 1, 0
    %vm308 = vcmp.eq.s32.totalorder %v306, 1
    %vm309 = vcmp.eq.s32.totalorder %v307, 1
    %310 = vset.pattern.permute.xlu0 4
    %311 = vperm.xlu0 %310, %v53
    %v312 = vpop.permute.xlu0 %311
    %v314 = vsel %vm308, %v312, 0.0
    %v315 = vsel %vm309, %v312, 0.0
    %v316 = vadd.s32 %v263, 1
    %v317 = vadd.s32 %v264, 1
    %vm318 = vcmp.ge.s32.totalorder %v316, 0
    %vm319 = vcmp.ge.s32.totalorder %v317, 0
    %vm320 = vcmp.le.s32.totalorder %v316, 15
    %vm321 = vcmp.le.s32.totalorder %v317, 15
    %vm322 = vmand %vm318, %vm320
    %vm323 = vmand %vm319, %vm321
    %vm324 = vmand %vm322, %vm277
    %vm325 = vmand %vm323, %vm278
    %vm326 = vmand %vm324, %vm281
    %vm327 = vmand %vm325, %vm282
    %v328 = vsel %vm326, 1, 0
    %v329 = vsel %vm327, 1, 0
    %vm330 = vcmp.eq.s32.totalorder %v328, 1
    %vm331 = vcmp.eq.s32.totalorder %v329, 1
    %332 = vset.pattern.permute.xlu0 5
    %333 = vperm.xlu0 %332, %v53
    %v334 = vpop.permute.xlu0 %333
    %v336 = vsel %vm330, %v334, 0.0
    %v337 = vsel %vm331, %v334, 0.0
    %vm338 = vcmp.ge.s32.totalorder %v265, 0
    %vm339 = vcmp.ge.s32.totalorder %v266, 0
    %vm340 = vmand %vm273, %vm338
    %vm341 = vmand %vm274, %vm339
    %vm342 = vcmp.le.s32.totalorder %v265, 15
    %vm343 = vcmp.le.s32.totalorder %v266, 15
    %vm344 = vmand %vm340, %vm342
    %vm345 = vmand %vm341, %vm343
    %v346 = vsel %vm344, 1, 0
    %v347 = vsel %vm345, 1, 0
    %vm348 = vcmp.eq.s32.totalorder %v346, 1
    %vm349 = vcmp.eq.s32.totalorder %v347, 1
    %350 = vset.pattern.permute.xlu0 6
    %351 = vperm.xlu0 %350, %v53
    %v352 = vpop.permute.xlu0 %351
    %v354 = vsel %vm348, %v352, 0.0
    %v355 = vsel %vm349, %v352, 0.0
    %vm356 = vmand %vm300, %vm338
    %vm357 = vmand %vm301, %vm339
    %vm358 = vmand %vm356, %vm342
    %vm359 = vmand %vm357, %vm343
    %v360 = vsel %vm358, 1, 0
    %v361 = vsel %vm359, 1, 0
    %vm362 = vcmp.eq.s32.totalorder %v360, 1
    %vm363 = vcmp.eq.s32.totalorder %v361, 1
    %364 = vset.pattern.permute.xlu0 7
    %365 = vperm.xlu0 %364, %v53
    %v366 = vpop.permute.xlu0 %365
    %v368 = vsel %vm362, %v366, 0.0
    %v369 = vsel %vm363, %v366, 0.0
    %vm370 = vmand %vm322, %vm338
    %vm371 = vmand %vm323, %vm339
    %vm372 = vmand %vm370, %vm342
    %vm373 = vmand %vm371, %vm343
    %v374 = vsel %vm372, 1, 0
    %v375 = vsel %vm373, 1, 0
    %vm376 = vcmp.eq.s32.totalorder %v374, 1
    %vm377 = vcmp.eq.s32.totalorder %v375, 1
    %378 = vset.pattern.permute.xlu0 8
    %379 = vperm.xlu0 %378, %v53
    %v380 = vpop.permute.xlu0 %379
    %v382 = vsel %vm376, %v380, 0.0
    %v383 = vsel %vm377, %v380, 0.0
    %v384 = vadd.s32 %v265, 1
    %v385 = vadd.s32 %v266, 1
    %vm386 = vcmp.ge.s32.totalorder %v384, 0
    %vm387 = vcmp.ge.s32.totalorder %v385, 0
    %vm388 = vmand %vm273, %vm386
    %vm389 = vmand %vm274, %vm387
    %vm390 = vcmp.le.s32.totalorder %v384, 15
    %vm391 = vcmp.le.s32.totalorder %v385, 15
    %vm392 = vmand %vm388, %vm390
    %vm393 = vmand %vm389, %vm391
    %v394 = vsel %vm392, 1, 0
    %v395 = vsel %vm393, 1, 0
    %vm396 = vcmp.eq.s32.totalorder %v394, 1
    %vm397 = vcmp.eq.s32.totalorder %v395, 1
    %398 = vset.pattern.permute.xlu0 9
    %399 = vperm.xlu0 %398, %v53
    %v400 = vpop.permute.xlu0 %399
    %v402 = vsel %vm396, %v400, 0.0
    %v403 = vsel %vm397, %v400, 0.0
    %vm404 = vmand %vm300, %vm386
    %vm405 = vmand %vm301, %vm387
    %vm406 = vmand %vm404, %vm390
    %vm407 = vmand %vm405, %vm391
    %v408 = vsel %vm406, 1, 0
    %v409 = vsel %vm407, 1, 0
    %vm410 = vcmp.eq.s32.totalorder %v408, 1
    %vm411 = vcmp.eq.s32.totalorder %v409, 1
    %412 = vset.pattern.permute.xlu0 10
    %413 = vperm.xlu0 %412, %v53
    %v414 = vpop.permute.xlu0 %413
    %v416 = vsel %vm410, %v414, 0.0
    %v417 = vsel %vm411, %v414, 0.0
    %vm418 = vmand %vm322, %vm386
    %vm419 = vmand %vm323, %vm387
    %vm420 = vmand %vm418, %vm390
    %vm421 = vmand %vm419, %vm391
    %v422 = vsel %vm420, 1, 0
    %v423 = vsel %vm421, 1, 0
    %vm424 = vcmp.eq.s32.totalorder %v422, 1
    %vm425 = vcmp.eq.s32.totalorder %v423, 1
    %426 = vset.pattern.permute.xlu0 11
    %427 = vperm.xlu0 %426, %v53
    %v428 = vpop.permute.xlu0 %427
    %v430 = vsel %vm424, %v428, 0.0
    %v431 = vsel %vm425, %v428, 0.0
    %433 = vset.pattern.permute.xlu0 0
    %434 = vperm.xlu0 %433, %v253
    %v435 = vpop.permute.xlu0 %434
    %v437 = vmul.f32 %v134, %v435
    %v438 = vmul.f32 %v136, %v435
    %440 = vset.pattern.permute.xlu0 1
    %441 = vperm.xlu0 %440, %v259
    %v442 = vpop.permute.xlu0 %441
    %v444 = vadd.f32 %v437, %v442
    %v445 = vadd.f32 %v438, %v442
    %v446 = vmax.f32 %v444, 0.0
    %v447 = vmax.f32 %v445, 0.0
    %v448 = vmul.f32 %v446, %v368
    %v449 = vmul.f32 %v447, %v369
    %450 = vrot.lane.b32.xlu0 %v446, 17
    %v451 = vpop.permute.xlu0 %450
    %452 = vrot.lane.b32.xlu0 %v447, 17
    %v453 = vpop.permute.xlu0 %452
    %vm454 = vcmp.lt.s32.totalorder %v261, 17
    %v455 = vsel %vm454, %v451, %v453
    %v456 = vsel %vm454, %v453, %v451
    %v457 = vmul.f32 %v456, %v294
    %v458 = vmul.f32 %v455, %v295
    %v459 = vadd.f32 %v448, %v457
    %v460 = vadd.f32 %v449, %v458
    %461 = vrot.lane.b32.xlu0 %v446, 16
    %v462 = vpop.permute.xlu0 %461
    %463 = vrot.lane.b32.xlu0 %v447, 16
    %v464 = vpop.permute.xlu0 %463
    %vm465 = vcmp.lt.s32.totalorder %v261, 16
    %v466 = vsel %vm465, %v462, %v464
    %v467 = vsel %vm465, %v464, %v462
    %v468 = vmul.f32 %v467, %v314
    %v469 = vmul.f32 %v466, %v315
    %v470 = vadd.f32 %v459, %v468
    %v471 = vadd.f32 %v460, %v469
    %472 = vrot.lane.b32.xlu0 %v446, 15
    %v473 = vpop.permute.xlu0 %472
    %474 = vrot.lane.b32.xlu0 %v447, 15
    %v475 = vpop.permute.xlu0 %474
    %vm476 = vcmp.lt.s32.totalorder %v261, 15
    %v477 = vsel %vm476, %v473, %v475
    %v478 = vsel %vm476, %v475, %v473
    %v479 = vmul.f32 %v478, %v336
    %v480 = vmul.f32 %v477, %v337
    %v481 = vadd.f32 %v470, %v479
    %v482 = vadd.f32 %v471, %v480
    %483 = vrot.lane.b32.xlu0 %v446, 1
    %v484 = vpop.permute.xlu0 %483
    %485 = vrot.lane.b32.xlu0 %v447, 1
    %v486 = vpop.permute.xlu0 %485
    %vm487 = vcmp.lt.s32.totalorder %v261, 1
    %v488 = vsel %vm487, %v484, %v486
    %v489 = vsel %vm487, %v486, %v484
    %v490 = vmul.f32 %v489, %v354
    %v491 = vmul.f32 %v488, %v355
    %v492 = vadd.f32 %v481, %v490
    %v493 = vadd.f32 %v482, %v491
    %494 = vrot.lane.b32.xlu0 %v446, 127
    %v495 = vpop.permute.xlu0 %494
    %496 = vrot.lane.b32.xlu0 %v447, 127
    %v497 = vpop.permute.xlu0 %496
    %vm498 = vcmp.lt.s32.totalorder %v261, 127
    %v499 = vsel %vm498, %v495, %v497
    %v500 = vsel %vm498, %v497, %v495
    %v501 = vmul.f32 %v499, %v382
    %v502 = vmul.f32 %v500, %v383
    %v503 = vadd.f32 %v492, %v501
    %v504 = vadd.f32 %v493, %v502
    %505 = vrot.lane.b32.xlu0 %v446, 113
    %v506 = vpop.permute.xlu0 %505
    %507 = vrot.lane.b32.xlu0 %v447, 113
    %v508 = vpop.permute.xlu0 %507
    %vm509 = vcmp.lt.s32.totalorder %v261, 113
    %v510 = vsel %vm509, %v506, %v508
    %v511 = vsel %vm509, %v508, %v506
    %v512 = vmul.f32 %v510, %v402
    %v513 = vmul.f32 %v511, %v403
    %v514 = vadd.f32 %v503, %v512
    %v515 = vadd.f32 %v504, %v513
    %516 = vrot.lane.b32.xlu0 %v446, 112
    %v517 = vpop.permute.xlu0 %516
    %518 = vrot.lane.b32.xlu0 %v447, 112
    %v519 = vpop.permute.xlu0 %518
    %vm520 = vcmp.lt.s32.totalorder %v261, 112
    %v521 = vsel %vm520, %v517, %v519
    %v522 = vsel %vm520, %v519, %v517
    %v523 = vmul.f32 %v521, %v416
    %v524 = vmul.f32 %v522, %v417
    %v525 = vadd.f32 %v514, %v523
    %v526 = vadd.f32 %v515, %v524
    %527 = vrot.lane.b32.xlu0 %v446, 111
    %v528 = vpop.permute.xlu0 %527
    %529 = vrot.lane.b32.xlu0 %v447, 111
    %v530 = vpop.permute.xlu0 %529
    %vm531 = vcmp.lt.s32.totalorder %v261, 111
    %v532 = vsel %vm531, %v528, %v530
    %v533 = vsel %vm531, %v530, %v528
    %v534 = vmul.f32 %v532, %v430
    %v535 = vmul.f32 %v533, %v431
    %v536 = vadd.f32 %v525, %v534
    %v537 = vadd.f32 %v526, %v535
    %v538 = vsel %vm138, %v536, 0.0
    %v539 = vrot.slane %v538, 4
    %v540 = vadd.f32 %v538, %v539
    %v541 = vrot.slane %v540, 2
    %v542 = vadd.f32 %v540, %v541
    %v543 = vrot.slane %v542, 1
    %v544 = vadd.f32 %v542, %v543
    %v545 = vsel %vm138, %v537, 0.0
    %v546 = vrot.slane %v545, 4
    %v547 = vadd.f32 %v545, %v546
    %v548 = vrot.slane %v547, 2
    %v549 = vadd.f32 %v547, %v548
    %v550 = vrot.slane %v549, 1
    %v551 = vadd.f32 %v549, %v550
    %553 = vset.pattern.permute.xlu0 2
    %554 = vperm.xlu0 %553, %v54
    %v555 = vpop.permute.xlu0 %554
    %v557 = vadd.f32 %v544, %v555
    %v558 = vadd.f32 %v551, %v555
    %v559 = vxor.u32 %v557, 2147483648
    %v560 = vxor.u32 %v558, 2147483648
    %v561 = vmul.f32 %v559, 1.442695
    %v562 = vpow.pop %v561
    %v563 = vmul.f32 %v560, 1.442695
    %v564 = vpow.pop %v563
    %v565 = vadd.f32 %v562, 1.0
    %v566 = vadd.f32 %v564, 1.0
    %v567 = vrcp.pop %v565
    %v568 = vmul.f32 1.0, %v567
    %v569 = vrcp.pop %v566
    %v570 = vmul.f32 1.0, %v569
    %v571 = vlaneseq
    %v572 = vshrl.u32 %v571, 7
    %v573 = vsub.s32 0, %v572
    %v574 = vrot.slane %v568, %v573
    %v575 = vlaneseq
    %v576 = vshrl.u32 %v575, 7
    %v577 = vsub.s32 0, %v576
    %v578 = vrot.slane %v570, %v577
    %v579 = vmul.f32 %v55, %v574
    %v580 = vmul.f32 %v56, %v578
    %v581 = vmul.f32 %v57, %v574
    %v582 = vmul.f32 %v58, %v578
    %v583 = vmul.f32 %v59, %v574
    %v584 = vmul.f32 %v60, %v578
    %v585 = vmul.f32 %v61, %v574
    %v586 = vmul.f32 %v62, %v578
    %587 = vst [vmem:[#allocation8] sm:$0xff] %v579
    %588 = vst [vmem:[#allocation8 + $0x8] sm:$0xff] %v580
    %589 = vst [vmem:[#allocation8 + $0x10] sm:$0xff] %v581
    %590 = vst [vmem:[#allocation8 + $0x18] sm:$0xff] %v582
    %591 = vst [vmem:[#allocation8 + $0x20] sm:$0xff] %v583
    %592 = vst [vmem:[#allocation8 + $0x28] sm:$0xff] %v584
    %593 = vst [vmem:[#allocation8 + $0x30] sm:$0xff] %v585
    %594 = vst [vmem:[#allocation8 + $0x38] sm:$0xff] %v586
    %v595 = vmul.f32 %v229, %v435
    %v596 = vmul.f32 %v231, %v435
    %v597 = vadd.f32 %v595, %v442
    %v598 = vadd.f32 %v596, %v442
    %v599 = vmax.f32 %v597, 0.0
    %v600 = vmax.f32 %v598, 0.0
    %v601 = vmul.f32 %v599, %v368
    %v602 = vmul.f32 %v600, %v369
    %603 = vrot.lane.b32.xlu0 %v599, 17
    %v604 = vpop.permute.xlu0 %603
    %605 = vrot.lane.b32.xlu0 %v600, 17
    %v606 = vpop.permute.xlu0 %605
    %v607 = vsel %vm454, %v604, %v606
    %v608 = vsel %vm454, %v606, %v604
    %v609 = vmul.f32 %v608, %v294
    %v610 = vmul.f32 %v607, %v295
    %v611 = vadd.f32 %v601, %v609
    %v612 = vadd.f32 %v602, %v610
    %613 = vrot.lane.b32.xlu0 %v599, 16
    %v614 = vpop.permute.xlu0 %613
    %615 = vrot.lane.b32.xlu0 %v600, 16
    %v616 = vpop.permute.xlu0 %615
    %v617 = vsel %vm465, %v614, %v616
    %v618 = vsel %vm465, %v616, %v614
    %v619 = vmul.f32 %v618, %v314
    %v620 = vmul.f32 %v617, %v315
    %v621 = vadd.f32 %v611, %v619
    %v622 = vadd.f32 %v612, %v620
    %623 = vrot.lane.b32.xlu0 %v599, 15
    %v624 = vpop.permute.xlu0 %623
    %625 = vrot.lane.b32.xlu0 %v600, 15
    %v626 = vpop.permute.xlu0 %625
    %v627 = vsel %vm476, %v624, %v626
    %v628 = vsel %vm476, %v626, %v624
    %v629 = vmul.f32 %v628, %v336
    %v630 = vmul.f32 %v627, %v337
    %v631 = vadd.f32 %v621, %v629
    %v632 = vadd.f32 %v622, %v630
    %633 = vrot.lane.b32.xlu0 %v599, 1
    %v634 = vpop.permute.xlu0 %633
    %635 = vrot.lane.b32.xlu0 %v600, 1
    %v636 = vpop.permute.xlu0 %635
    %v637 = vsel %vm487, %v634, %v636
    %v638 = vsel %vm487, %v636, %v634
    %v639 = vmul.f32 %v638, %v354
    %v640 = vmul.f32 %v637, %v355
    %v641 = vadd.f32 %v631, %v639
    %v642 = vadd.f32 %v632, %v640
    %643 = vrot.lane.b32.xlu0 %v599, 127
    %v644 = vpop.permute.xlu0 %643
    %645 = vrot.lane.b32.xlu0 %v600, 127
    %v646 = vpop.permute.xlu0 %645
    %v647 = vsel %vm498, %v644, %v646
    %v648 = vsel %vm498, %v646, %v644
    %v649 = vmul.f32 %v647, %v382
    %v650 = vmul.f32 %v648, %v383
    %v651 = vadd.f32 %v641, %v649
    %v652 = vadd.f32 %v642, %v650
    %653 = vrot.lane.b32.xlu0 %v599, 113
    %v654 = vpop.permute.xlu0 %653
    %655 = vrot.lane.b32.xlu0 %v600, 113
    %v656 = vpop.permute.xlu0 %655
    %v657 = vsel %vm509, %v654, %v656
    %v658 = vsel %vm509, %v656, %v654
    %v659 = vmul.f32 %v657, %v402
    %v660 = vmul.f32 %v658, %v403
    %v661 = vadd.f32 %v651, %v659
    %v662 = vadd.f32 %v652, %v660
    %663 = vrot.lane.b32.xlu0 %v599, 112
    %v664 = vpop.permute.xlu0 %663
    %665 = vrot.lane.b32.xlu0 %v600, 112
    %v666 = vpop.permute.xlu0 %665
    %v667 = vsel %vm520, %v664, %v666
    %v668 = vsel %vm520, %v666, %v664
    %v669 = vmul.f32 %v667, %v416
    %v670 = vmul.f32 %v668, %v417
    %v671 = vadd.f32 %v661, %v669
    %v672 = vadd.f32 %v662, %v670
    %673 = vrot.lane.b32.xlu0 %v599, 111
    %v674 = vpop.permute.xlu0 %673
    %675 = vrot.lane.b32.xlu0 %v600, 111
    %v676 = vpop.permute.xlu0 %675
    %v677 = vsel %vm531, %v674, %v676
    %v678 = vsel %vm531, %v676, %v674
    %v679 = vmul.f32 %v677, %v430
    %v680 = vmul.f32 %v678, %v431
    %v681 = vadd.f32 %v671, %v679
    %v682 = vadd.f32 %v672, %v680
    %v683 = vsel %vm138, %v681, 0.0
    %v684 = vrot.slane %v683, 4
    %v685 = vadd.f32 %v683, %v684
    %v686 = vrot.slane %v685, 2
    %v687 = vadd.f32 %v685, %v686
    %v688 = vrot.slane %v687, 1
    %v689 = vadd.f32 %v687, %v688
    %v690 = vsel %vm138, %v682, 0.0
    %v691 = vrot.slane %v690, 4
    %v692 = vadd.f32 %v690, %v691
    %v693 = vrot.slane %v692, 2
    %v694 = vadd.f32 %v692, %v693
    %v695 = vrot.slane %v694, 1
    %v696 = vadd.f32 %v694, %v695
    %v697 = vadd.f32 %v689, %v555
    %v698 = vadd.f32 %v696, %v555
    %v699 = vxor.u32 %v697, 2147483648
    %v700 = vxor.u32 %v698, 2147483648
    %v701 = vmul.f32 %v699, 1.442695
    %v702 = vpow.pop %v701
    %v703 = vmul.f32 %v700, 1.442695
    %v704 = vpow.pop %v703
    %v705 = vadd.f32 %v702, 1.0
    %v706 = vadd.f32 %v704, 1.0
    %v707 = vrcp.pop %v705
    %v708 = vmul.f32 1.0, %v707
    %v709 = vrcp.pop %v706
    %v710 = vmul.f32 1.0, %v709
    %v711 = vlaneseq
    %v712 = vshrl.u32 %v711, 7
    %v713 = vsub.s32 0, %v712
    %v714 = vrot.slane %v708, %v713
    %v715 = vlaneseq
    %v716 = vshrl.u32 %v715, 7
    %v717 = vsub.s32 0, %v716
    %v718 = vrot.slane %v710, %v717
    %v719 = vmul.f32 %v154, %v714
    %v720 = vmul.f32 %v155, %v718
    %v721 = vmul.f32 %v156, %v714
    %v722 = vmul.f32 %v157, %v718
    %v723 = vmul.f32 %v158, %v714
    %v724 = vmul.f32 %v159, %v718
    %v725 = vmul.f32 %v160, %v714
    %v726 = vmul.f32 %v161, %v718
    %s727 = scalar_lea.vmem [#allocation8], 64
    %728 = vst [vmem:[%s727] sm:$0xff] %v719
    %729 = vst [vmem:[%s727 + $0x8] sm:$0xff] %v720
    %730 = vst [vmem:[%s727 + $0x10] sm:$0xff] %v721
    %731 = vst [vmem:[%s727 + $0x18] sm:$0xff] %v722
    %732 = vst [vmem:[%s727 + $0x20] sm:$0xff] %v723
    %733 = vst [vmem:[%s727 + $0x28] sm:$0xff] %v724
    %734 = vst [vmem:[%s727 + $0x30] sm:$0xff] %v725
    %735 = vst [vmem:[%s727 + $0x38] sm:$0xff] %v726
    // Predicated region
    $region26: #{tpu_custom_call.1} parent=1 // pred_check
      _
    $region27: #{tpu_custom_call.1} parent=1 // pred_check_branch
      %737 = sbr.rel (0) target = $region29
    $region28: #{tpu_custom_call.1} parent=1 // pred_region
      %s739 = ssub.s32 2048, 2048
      %740 = vsyncadd [#allocation4], %s739
      %s741 = sshll.u32 [#allocation8], 4
      %s742 = int_to_ptr.vmem [resolvable:$true] %s741
      %747 = dma.vmem_to_hbm [thread:$0]  %s742, 2048, %s3, [#allocation4], 256, 256, 16
    $region29: #{tpu_custom_call.1} parent=1 // pred_fallthru
      _
    // Predicated region
    $region30: #{tpu_custom_call.1} parent=1 // pred_check
      _
    $region31: #{tpu_custom_call.1} parent=1 // pred_check_branch
      %749 = sbr.rel (0) target = $region33
    $region32: #{tpu_custom_call.1} parent=1 // pred_region
      %750 = dma.done [#allocation4], 2048
    $region33: #{tpu_custom_call.1} parent=1 // pred_fallthru
      _
    %751 = vsyncpa [#allocation3], 1
    %752 = vsyncpa [#allocation6], 1
    %753 = vsyncpa [#allocation4], 1

</llo_original>
